<compile_context>
chip_gen: v5e
topology: v5e:2x2
jax: 0.10.0
libtpu: 0.0.40
codegen_flags: <defaults>
</compile_context>

<pallas_src>
import functools
import math

import jax
import jax.numpy as jnp
from jax.experimental import pallas as pl
from jax.experimental.pallas import tpu as pltpu


def _round_up(x: int, m: int) -> int:
    return -(-x // m) * m


def build_fixed_table(c_in, d_model):
    """Matches the PyTorch FixedEmbedding.__init__ sinusoidal table exactly (f32)."""
    position = jnp.arange(c_in, dtype=jnp.float32)[:, None]            # (c_in, 1)
    div_term = jnp.exp(
        jnp.arange(0, d_model, 2, dtype=jnp.float32)
        * -(math.log(10000.0) / d_model)
    )                                                                  # (d_model//2,)
    w = jnp.zeros((c_in, d_model), dtype=jnp.float32)
    w = w.at[:, 0::2].set(jnp.sin(position * div_term))
    w = w.at[:, 1::2].set(jnp.cos(position * div_term))
    return w


def _fixed_embedding_kernel(idx_ref, table_ref, o_ref, *, c_in, k):
    """One grid step: gather k tokens per output row via a one-hot MXU matmul.

    idx_ref   : (rows, k)            int32   token indices (k tokens packed per row)
    table_ref : (k*c_in, k*d_model)  float32 block-diagonal fixed table (VMEM resident)
    o_ref     : (rows, k*d_model)    float32 lane-dense gathered rows
    """
    idx = idx_ref[...]                                   # (rows, k) int32
    rows = o_ref.shape[0]
    kdim = k * c_in

    # One-hot over the block-diagonal table's row space.  Group p can only hit
    # columns [p*c_in, (p+1)*c_in), so the k comparison masks are disjoint and a
    # plain sum builds the combined 0/1 matrix.  All VPU work, deep in slack.
    col = jax.lax.broadcasted_iota(jnp.int32, (rows, kdim), 1)
    onehot = jnp.zeros((rows, kdim), dtype=jnp.float32)
    for p in range(k):
        onehot = onehot + (col == (idx[:, p:p + 1] + p * c_in)).astype(jnp.float32)

    # (rows, k*c_in) @ (k*c_in, k*d_model) on the MXU.  Exact for a 0/1 one-hot
    # against the f32 table (do NOT cast to bf16 -- it would change numerics).
    # TODO(synk): if ever reused with a large c_in, chunk this contraction over c_in.
    o_ref[...] = jnp.dot(
        onehot, table_ref[...], preferred_element_type=jnp.float32
    ).astype(o_ref.dtype)


def fixed_embedding_forward(x_idx, table):
    """out = table[x_idx]; shape x_idx.shape + (d_model,).  (.detach() is a no-op:
    the table is a constant.)  Note: out-of-range / negative indices silently
    produce all-zero rows (PyTorch nn.Embedding would raise)."""
    c_in, d_model = table.shape
    orig_shape = x_idx.shape
    flat = x_idx.reshape(-1).astype(jnp.int32)
    n = flat.shape[0]

    # --- Lane packing: with d_model < 128 a (rows, d_model) output block would
    # lane-pad in VMEM and the writeback would be lane-sparse masked stores.
    # Pack k tokens per output row so the block's last dim is 128-wide; the HBM
    # layout of (n//k, k*d_model) is bit-identical to (n, d_model).
    if d_model < 128 and 128 % d_model == 0:
        k = math.gcd(128 // d_model, n)
    else:
        k = 1
    out_width = k * d_model
    n_rows = n // k

    # Block-diagonal expanded table: k copies of `table` on the diagonal.
    table_ex = table if k == 1 else jnp.kron(jnp.eye(k, dtype=table.dtype), table)

    # --- Tile rows: target a ~1-4 MiB output slab per grid step (hides the
    # ~0.35us/step overhead on v5e/v6e/v7x) while the double-buffered working set
    # (output + lane-padded index blocks + table + one-hot temp) stays well under
    # every generation's scoped-VMEM limit, including v7x's 64 MiB physical.
    bytes_per_out_row = out_width * 4
    tile_rows = min(2048, max(8, (8 * 1024 * 1024) // (2 * bytes_per_out_row)))
    tile_rows = max(8, (tile_rows // 8) * 8)
    if n_rows <= tile_rows:
        if n_rows >= 1024:
            # Keep >= 2 grid steps so both v7x TensorCores get work.
            tile_rows = _round_up(pl.cdiv(n_rows, 2), 8)
        else:
            tile_rows = _round_up(max(n_rows, 1), 8)

    grid = pl.cdiv(n_rows, tile_rows)

    # Pad ONLY the tiny int32 index array so every input block stays in-bounds.
    # The output keeps its exact (n_rows, out_width) shape: Pallas discards the
    # out-of-bounds rows of the partial last output block, so there is no
    # post-kernel slice (no extra HBM read+write of the output).
    rows_pad = grid * tile_rows
    idx2d = flat.reshape(n_rows, k)
    if rows_pad != n_rows:
        idx2d = jnp.pad(idx2d, ((0, rows_pad - n_rows), (0, 0)))

    kernel = functools.partial(_fixed_embedding_kernel, c_in=c_in, k=k)

    out = pl.pallas_call(
        kernel,
        out_shape=jax.ShapeDtypeStruct((n_rows, out_width), table.dtype),
        grid_spec=pltpu.PrefetchScalarGridSpec(
            num_scalar_prefetch=0,
            grid=(grid,),
            in_specs=[
                pl.BlockSpec((tile_rows, k), lambda i: (i, 0)),      # packed indices
                pl.BlockSpec(table_ex.shape, lambda i: (0, 0)),      # resident table
            ],
            out_specs=pl.BlockSpec((tile_rows, out_width), lambda i: (i, 0)),
        ),
        compiler_params=pltpu.CompilerParams(
            dimension_semantics=("parallel",),
            vmem_limit_bytes=32 * 1024 * 1024,
        ),
    )(idx2d, table_ex)

    # (n_rows, k*d_model) is row-major identical to (n, d_model): pure reshape.
    return out.reshape(*orig_shape, d_model)


if __name__ == "__main__":
    # Small shapes consistent with the module: x is (batch, seq) integer indices
    # into a (c_in, d_model) fixed sinusoidal table.
    B, L = 2, 16
    c_in, d_model = 24, 32

    table = build_fixed_table(c_in, d_model)

    key = jax.random.PRNGKey(0)
    x = jax.random.randint(key, (B, L), minval=0, maxval=c_in, dtype=jnp.int32)

    out = fixed_embedding_forward(x, table)
    out = jax.block_until_ready(out)

    ref = jnp.take(table, x, axis=0)              # pure-JAX reference: table[x]
    assert out.shape == (B, L, d_model)
    assert jnp.allclose(out, ref, atol=1e-6, rtol=0.0)

    print("KERNEL_OK")
</pallas_src>

<mosaic_0001>
module attributes {stable_mosaic.version = 11 : i64} {
  func.func @_fixed_embedding_kernel(%arg0: i32, %arg1: memref<8x4xi32, #tpu.memory_space<vmem>>, %arg2: memref<96x128xf32, #tpu.memory_space<vmem>>, %arg3: memref<8x128xf32, #tpu.memory_space<vmem>>) attributes {dimension_semantics = [#tpu.dimension_semantics<parallel>], iteration_bounds = array<i64: 1>, scalar_prefetch = 0 : i64, scratch_operands = 0 : i64, tpu.core_type = #tpu.core_type<tc>, window_params = [{transform_indices = @transform_0, window_bounds = array<i64: 8, 4>}, {pipeline_mode = #tpu.pipeline_mode<synchronous>, transform_indices = @transform_1, window_bounds = array<i64: 96, 128>}, {transform_indices = @transform_2, window_bounds = array<i64: 8, 128>}]} {
    %c0 = arith.constant 0 : index
    %c0_0 = arith.constant 0 : index
    %0 = vector.load %arg1[%c0, %c0_0] : memref<8x4xi32, #tpu.memory_space<vmem>>, vector<8x4xi32>
    %1 = tpu.iota {dimensions = array<i32: 1>} : vector<8x96xi32>
    %cst = arith.constant 0.000000e+00 : f32
    %2 = vector.broadcast %cst : f32 to vector<8x96xf32>
    %3 = vector.extract_strided_slice %0 {offsets = [0, 0], sizes = [8, 1], strides = [1, 1]} : vector<8x4xi32> to vector<8x1xi32>
    %c0_i32 = arith.constant 0 : i32
    %4 = vector.broadcast %c0_i32 : i32 to vector<8x1xi32>
    %5 = arith.addi %3, %4 : vector<8x1xi32>
    %6 = vector.broadcast %5 : vector<8x1xi32> to vector<8x96xi32>
    %7 = arith.cmpi eq, %1, %6 : vector<8x96xi32>
    %8 = arith.extui %7 : vector<8x96xi1> to vector<8x96xi32>
    %9 = arith.sitofp %8 : vector<8x96xi32> to vector<8x96xf32>
    %10 = arith.addf %2, %9 : vector<8x96xf32>
    %11 = vector.extract_strided_slice %0 {offsets = [0, 1], sizes = [8, 1], strides = [1, 1]} : vector<8x4xi32> to vector<8x1xi32>
    %c24_i32 = arith.constant 24 : i32
    %12 = vector.broadcast %c24_i32 : i32 to vector<8x1xi32>
    %13 = arith.addi %11, %12 : vector<8x1xi32>
    %14 = vector.broadcast %13 : vector<8x1xi32> to vector<8x96xi32>
    %15 = arith.cmpi eq, %1, %14 : vector<8x96xi32>
    %16 = arith.extui %15 : vector<8x96xi1> to vector<8x96xi32>
    %17 = arith.sitofp %16 : vector<8x96xi32> to vector<8x96xf32>
    %18 = arith.addf %10, %17 : vector<8x96xf32>
    %19 = vector.extract_strided_slice %0 {offsets = [0, 2], sizes = [8, 1], strides = [1, 1]} : vector<8x4xi32> to vector<8x1xi32>
    %c48_i32 = arith.constant 48 : i32
    %20 = vector.broadcast %c48_i32 : i32 to vector<8x1xi32>
    %21 = arith.addi %19, %20 : vector<8x1xi32>
    %22 = vector.broadcast %21 : vector<8x1xi32> to vector<8x96xi32>
    %23 = arith.cmpi eq, %1, %22 : vector<8x96xi32>
    %24 = arith.extui %23 : vector<8x96xi1> to vector<8x96xi32>
    %25 = arith.sitofp %24 : vector<8x96xi32> to vector<8x96xf32>
    %26 = arith.addf %18, %25 : vector<8x96xf32>
    %27 = vector.extract_strided_slice %0 {offsets = [0, 3], sizes = [8, 1], strides = [1, 1]} : vector<8x4xi32> to vector<8x1xi32>
    %c72_i32 = arith.constant 72 : i32
    %28 = vector.broadcast %c72_i32 : i32 to vector<8x1xi32>
    %29 = arith.addi %27, %28 : vector<8x1xi32>
    %30 = vector.broadcast %29 : vector<8x1xi32> to vector<8x96xi32>
    %31 = arith.cmpi eq, %1, %30 : vector<8x96xi32>
    %32 = arith.extui %31 : vector<8x96xi1> to vector<8x96xi32>
    %33 = arith.sitofp %32 : vector<8x96xi32> to vector<8x96xf32>
    %34 = arith.addf %26, %33 : vector<8x96xf32>
    %c0_1 = arith.constant 0 : index
    %c0_2 = arith.constant 0 : index
    %35 = vector.load %arg2[%c0_1, %c0_2] : memref<96x128xf32, #tpu.memory_space<vmem>>, vector<96x128xf32>
    %cst_3 = arith.constant dense<0.000000e+00> : vector<8x128xf32>
    %36 = tpu.matmul %34, %35, %cst_3 {dimension_numbers = #tpu.dot_dimension_numbers<[1], [0], [0], [1], [0, 0, 1, 1], [], []>} : vector<8x96xf32>, vector<96x128xf32>, vector<8x128xf32> -> vector<8x128xf32>
    %c0_4 = arith.constant 0 : index
    %c0_5 = arith.constant 0 : index
    %37 = vector.load %arg3[%c0_4, %c0_5] : memref<8x128xf32, #tpu.memory_space<vmem>>, vector<8x128xf32>
    tpu.vector_store %arg3[%c0_4, %c0_5], %36 {strides = array<i32>} : memref<8x128xf32, #tpu.memory_space<vmem>>, vector<8x128xf32>,
    return
  }
  func.func @transform_0(%arg0: i32) -> (i32, i32) {
    %c0_i32 = arith.constant 0 : i32
    %c0_i32_0 = arith.constant 0 : i32
    return %arg0, %c0_i32 : i32, i32
  }
  func.func @transform_1(%arg0: i32) -> (i32, i32) {
    %c0_i32 = arith.constant 0 : i32
    %c0_i32_0 = arith.constant 0 : i32
    %c0_i32_1 = arith.constant 0 : i32
    return %c0_i32, %c0_i32_0 : i32, i32
  }
  func.func @transform_2(%arg0: i32) -> (i32, i32) {
    %c0_i32 = arith.constant 0 : i32
    %c0_i32_0 = arith.constant 0 : i32
    return %arg0, %c0_i32 : i32, i32
  }
}

</mosaic_0001>

<llo_original>
// kernel: tpu_custom_call.1
$region0: #{tpu_custom_call.1}
  #allocation0 [shape = 'u32[]', space=smem, size = 0x4, offset = 0x4, fixed_abs, tag = 'smem constant byte address 0x4 - core index']
  #allocation1 [shape = 'u32[72,128]{1,0:T(1,128)}', space=vmem, size = 0x9000, scoped, tag = 'internal scratch']
  %s0 = inlined_call_operand.vmem [shape: s32[8,4], index: 0, kind: input, shape index: {}]
  %s1 = inlined_call_operand.hbm [shape: f32[96,128], index: 1, kind: input, shape index: {}]
  %s2 = inlined_call_operand.hbm [shape: f32[8,128], index: 2, kind: output, shape index: {}]
  %s3 = sld [smem:[#allocation0]]
  $region22: #{tpu_custom_call.1} parent=0
    _
  %s5 = ssub.s32 1, %s3
  %s6 = scalar_select 0, %s5, %s3
  $region1: #{tpu_custom_call.1} parent=0
    #allocation2 [shape = 'u8[49152]{0}', space=vmem, size = 0xc000, scoped, tag = 'input window, operand 1, single buffered']
    #allocation3 [shape = 's32[1]{0}', space=sflag, size = 0x4, scoped, tag = 'scoped memory for tpu_custom_call.1']
    #allocation4 [shape = 's32[1]{0}', space=sflag, size = 0x4, scoped, tag = 'scoped memory for tpu_custom_call.1']
    #allocation5 [shape = 'u8[4096]{0}', space=vmem, size = 0x1000, scoped, tag = 'output window, operand 0, single buffered']
    %7 = vsyncpa [#allocation3], 0
    %8 = vsyncpa [#allocation4], 0
    // Predicated region
    $region2: #{tpu_custom_call.1} parent=1 // pred_check
      _
    $region3: #{tpu_custom_call.1} parent=1 // pred_check_branch
      %10 = sbr.rel (0) target = $region5
    $region4: #{tpu_custom_call.1} parent=1 // pred_region
      _
    $region5: #{tpu_custom_call.1} parent=1 // pred_fallthru
      _
    // Predicated region
    $region6: #{tpu_custom_call.1} parent=1 // pred_check
      _
    $region7: #{tpu_custom_call.1} parent=1 // pred_check_branch
      %12 = sbr.rel (0) target = $region9
    $region8: #{tpu_custom_call.1} parent=1 // pred_region
      %14 = vsyncadd [#allocation3], 0
      %s15 = sshll.u32 %s1, 4
      %s16 = int_to_ptr.hbm [resolvable:$true] %s15
      %s17 = sshll.u32 [#allocation2], 4
      %s18 = int_to_ptr.vmem [resolvable:$true] %s17
      %23 = dma.hbm_to_vmem [thread:$0]  %s16, 1536, %s18, [#allocation3], 128, 128, 8
    $region9: #{tpu_custom_call.1} parent=1 // pred_fallthru
      _
    // Predicated region
    $region10: #{tpu_custom_call.1} parent=1 // pred_check
      _
    $region11: #{tpu_custom_call.1} parent=1 // pred_check_branch
      %25 = sbr.rel (0) target = $region13
    $region12: #{tpu_custom_call.1} parent=1 // pred_region
      %27 = dma.done [#allocation3], 1536
    $region13: #{tpu_custom_call.1} parent=1 // pred_fallthru
      _
    %v28 = vld [vmem:[%s0] sm:$0xff]
    %v29 = vlaneseq
    %v30 = vand.u32 %v29, 127
    %31 = vset.pattern.permute.xlu0 0
    %32 = vperm.xlu0 %31, %v28
    %v33 = vpop.permute.xlu0 %32
    %vm34 = vcmp.eq.s32.totalorder %v30, %v33
    %v35 = vsel %vm34, 1, 0
    %v36 = vcvt.s32.f32 %v35
    %v37 = vadd.f32 %v36, 0.0
    %v38 = vadd.s32 %v28, 24
    %39 = vset.pattern.permute.xlu0 1
    %40 = vperm.xlu0 %39, %v38
    %v41 = vpop.permute.xlu0 %40
    %vm42 = vcmp.eq.s32.totalorder %v30, %v41
    %v43 = vsel %vm42, 1, 0
    %v44 = vcvt.s32.f32 %v43
    %v45 = vadd.f32 %v37, %v44
    %v46 = vadd.s32 %v28, 48
    %47 = vset.pattern.permute.xlu0 2
    %48 = vperm.xlu0 %47, %v46
    %v49 = vpop.permute.xlu0 %48
    %vm50 = vcmp.eq.s32.totalorder %v30, %v49
    %v51 = vsel %vm50, 1, 0
    %v52 = vcvt.s32.f32 %v51
    %v53 = vadd.f32 %v45, %v52
    %v54 = vadd.s32 %v28, 72
    %55 = vset.pattern.permute.xlu0 3
    %56 = vperm.xlu0 %55, %v54
    %v57 = vpop.permute.xlu0 %56
    %vm58 = vcmp.eq.s32.totalorder %v30, %v57
    %v59 = vsel %vm58, 1, 0
    %v60 = vcvt.s32.f32 %v59
    %v61 = vadd.f32 %v53, %v60
    %v62 = vld [vmem:[#allocation2] sm:$0xff]
    %v63 = vld [vmem:[#allocation2 + $0x8] sm:$0xff]
    %v64 = vld [vmem:[#allocation2 + $0x10] sm:$0xff]
    %v65 = vld [vmem:[#allocation2 + $0x18] sm:$0xff]
    %v66 = vld [vmem:[#allocation2 + $0x20] sm:$0xff]
    %v67 = vld [vmem:[#allocation2 + $0x28] sm:$0xff]
    %v68 = vld [vmem:[#allocation2 + $0x30] sm:$0xff]
    %v69 = vld [vmem:[#allocation2 + $0x38] sm:$0xff]
    %v70 = vld [vmem:[#allocation2 + $0x40] sm:$0xff]
    %v71 = vld [vmem:[#allocation2 + $0x48] sm:$0xff]
    %v72 = vld [vmem:[#allocation2 + $0x50] sm:$0xff]
    %v73 = vld [vmem:[#allocation2 + $0x58] sm:$0xff]
    %vm74 = vcmask 785408
    %v76 = vsel %vm74, %v61, 0
    %78 = vmatpush.msra.mxu0 0.0
    %79 = vmatpush.msra.mxu0 0.0
    %80 = vmatpush.msra.mxu0 0.0
    %81 = vmatpush.msra.mxu0 0.0
    %82 = vmatpush.msra.mxu0 %v73
    %83 = vmatpush.msra.mxu0 %v72
    %84 = vmatpush.msra.mxu0 %v71
    %85 = vmatpush.msra.mxu0 %v70
    %86 = vmatpush.msra.mxu0 %v69
    %87 = vmatpush.msra.mxu0 %v68
    %88 = vmatpush.msra.mxu0 %v67
    %89 = vmatpush.msra.mxu0 %v66
    %90 = vmatpush.msra.mxu0 %v65
    %91 = vmatpush.msra.mxu0 %v64
    %92 = vmatpush.msra.mxu0 %v63
    %93 = vmatpush.msra.mxu0 %v62
    %94 = vmatmul.f32.gmra.mxu0 %v76
    %v95 = vpop.f32.mrf.mxu0
    %v96 = vadd.f32 0.0, %v95
    %97 = vdwg.mxu0
    %98 = vst [vmem:[#allocation5] sm:$0xff] %v96
    // Predicated region
    $region14: #{tpu_custom_call.1} parent=1 // pred_check
      _
    $region15: #{tpu_custom_call.1} parent=1 // pred_check_branch
      %100 = sbr.rel (0) target = $region17
    $region16: #{tpu_custom_call.1} parent=1 // pred_region
      %102 = vsyncadd [#allocation4], 0
      %s104 = sshll.u32 [#allocation5], 4
      %s105 = int_to_ptr.vmem [resolvable:$true] %s104
      %s106 = sshll.u32 %s2, 4
      %s107 = int_to_ptr.hbm [resolvable:$true] %s106
      %109 = dma.vmem_to_hbm [thread:$0]  %s105, 128, %s107, [#allocation4]
    $region17: #{tpu_custom_call.1} parent=1 // pred_fallthru
      _
    // Predicated region
    $region18: #{tpu_custom_call.1} parent=1 // pred_check
      _
    $region19: #{tpu_custom_call.1} parent=1 // pred_check_branch
      %111 = sbr.rel (0) target = $region21
    $region20: #{tpu_custom_call.1} parent=1 // pred_region
      %113 = dma.done [#allocation4], 128
    $region21: #{tpu_custom_call.1} parent=1 // pred_fallthru
      _
    %114 = vsyncpa [#allocation3], 1
    %115 = vsyncpa [#allocation4], 1

</llo_original>
